<compile_context>
chip_gen: v7x
topology: tpu7x:2x2x1
jax: 0.10.0
libtpu: 0.0.40
codegen_flags: <defaults>
</compile_context>

<pallas_src>
import functools

import jax
import jax.numpy as jnp
from jax.experimental import pallas as pl
from jax.experimental.pallas import tpu as pltpu

SLOPE = 0.1  # leaky-relu negative slope (MLP(slope=0.1, activation='lrelu'))


def _lrelu(h):
    return jnp.where(h >= 0, h, SLOPE * h)


def laplace_mlp_fused_kernel(x_ref, w0_ref, b0_ref, w1_ref, b1_ref,
                             w2_ref, b2_ref, out_ref, *, out_dim):
    """Fused (mean || logvar) 3-layer MLP + exp on the logvar lanes.

    Output lanes: [0, out_dim) = mean, [out_dim, 2*out_dim) = exp(logvar),
    [2*out_dim, 128) = zero padding (lane-dense store).
    """
    x = x_ref[...]

    # Layer 0: Linear + lrelu   (f32 accumulate, f32 epilogue)
    h = jnp.dot(x, w0_ref[...], preferred_element_type=jnp.float32) + b0_ref[...]
    h = _lrelu(h)
    # Layer 1: Linear + lrelu
    h = jnp.dot(h.astype(w1_ref.dtype), w1_ref[...],
                preferred_element_type=jnp.float32) + b1_ref[...]
    h = _lrelu(h)
    # Layer 2 (last): Linear, no activation
    h = jnp.dot(h.astype(w2_ref.dtype), w2_ref[...],
                preferred_element_type=jnp.float32) + b2_ref[...]

    col = jax.lax.broadcasted_iota(jnp.int32, h.shape, dimension=1)
    is_logvar = (col >= out_dim) & (col < 2 * out_dim)
    out_ref[...] = jnp.where(is_logvar, jnp.exp(h), h)


def prepare_fused_params(params, use_bf16=True):
    """One-time fusion of the two MLPs' weights (hoisted out of the hot path).

    params: dict with mean_w{0,1,2}, mean_b{0,1,2}, lv_w{0,1,2}, lv_b{0,1,2};
    weights stored [in_dim, out_dim] (transpose of PyTorch Linear), biases
    [1, out_dim].  Returns ((w0,b0,w1,b1,w2,b2), out_dim) with:
        w0 = [mean_w0 | lv_w0]                 (D_in, 2H)
        w1 = blockdiag(mean_w1, lv_w1)         (2H, 2H)
        w2 = blockdiag(mean_w2, lv_w2) zero-padded to 128 lanes  (2H, 128)
    """
    H = params["mean_w1"].shape[0]
    out_dim = int(params["mean_w2"].shape[1])
    H2, O2 = 2 * H, 2 * out_dim
    OP = max(128, ((O2 + 127) // 128) * 128)  # lane-dense padded output width
    wdtype = jnp.bfloat16 if use_bf16 else jnp.float32

    zH = jnp.zeros((H, H), jnp.float32)
    zO = jnp.zeros((H, out_dim), jnp.float32)

    w0 = jnp.concatenate([params["mean_w0"], params["lv_w0"]], axis=1).astype(wdtype)
    b0 = jnp.concatenate([params["mean_b0"], params["lv_b0"]], axis=1)

    w1 = jnp.concatenate(
        [jnp.concatenate([params["mean_w1"], zH], axis=1),
         jnp.concatenate([zH, params["lv_w1"]], axis=1)], axis=0).astype(wdtype)
    b1 = jnp.concatenate([params["mean_b1"], params["lv_b1"]], axis=1)

    w2_small = jnp.concatenate(
        [jnp.concatenate([params["mean_w2"], zO], axis=1),
         jnp.concatenate([zO, params["lv_w2"]], axis=1)], axis=0)
    b2_small = jnp.concatenate([params["mean_b2"], params["lv_b2"]], axis=1)
    w2 = jnp.zeros((H2, OP), jnp.float32).at[:, :O2].set(w2_small).astype(wdtype)
    b2 = jnp.zeros((1, OP), jnp.float32).at[:, :O2].set(b2_small)

    return (w0, b0, w1, b1, w2, b2), out_dim


@functools.partial(jax.jit, static_argnames=("out_dim", "block_b"))
def laplace_mlp_forward(x, fused, *, out_dim, block_b=2048):
    """Returns (mean, var), each [B, out_dim], matching LaplaceMLP.forward."""
    w0, b0, w1, b1, w2, b2 = fused
    B, D_in = x.shape
    H2 = w1.shape[0]
    OP = w2.shape[1]

    assert block_b % 256 == 0, "block_b must be a multiple of 256"

    # Tile selection: big tiles amortize per-step grid overhead; when a single
    # tile would cover B (and B >= 512) split into >=2 steps so the 'parallel'
    # axis shards across v7x's two TensorCores.
    if B <= block_b:
        TB = max(256, ((B // 2) // 256) * 256) if B >= 512 else B
    else:
        TB = block_b

    xin = x.astype(w0.dtype)
    kernel = functools.partial(laplace_mlp_fused_kernel, out_dim=out_dim)

    fused_out = pl.pallas_call(
        kernel,
        out_shape=jax.ShapeDtypeStruct((B, OP), jnp.float32),
        grid_spec=pltpu.PrefetchScalarGridSpec(
            num_scalar_prefetch=0,
            grid=(pl.cdiv(B, TB),),
            in_specs=[
                pl.BlockSpec((TB, D_in), lambda i: (i, 0)),   # x: tiled over batch
                pl.BlockSpec((D_in, H2), lambda i: (0, 0)),   # W0f: VMEM-resident
                pl.BlockSpec((1, H2), lambda i: (0, 0)),      # b0f
                pl.BlockSpec((H2, H2), lambda i: (0, 0)),     # W1f
                pl.BlockSpec((1, H2), lambda i: (0, 0)),      # b1f
                pl.BlockSpec((H2, OP), lambda i: (0, 0)),     # W2f (lane-padded)
                pl.BlockSpec((1, OP), lambda i: (0, 0)),      # b2f (lane-padded)
            ],
            out_specs=pl.BlockSpec((TB, OP), lambda i: (i, 0)),
        ),
        compiler_params=pltpu.CompilerParams(
            dimension_semantics=("parallel",),
            vmem_limit_bytes=32 * 1024 * 1024),
    )(xin, w0, b0, w1, b1, w2, b2)

    # Module semantics: return (mean, var).  (Consumers that want to avoid the
    # small sub-lane slices can use fused_out[:, :2*out_dim] directly.)
    mean = fused_out[:, :out_dim]
    var = fused_out[:, out_dim:2 * out_dim]
    return mean, var


def init_params(key, input_dim, hidden_dim, output_dim):
    """Deterministic synthetic init (PyTorch-Linear-like uniform fan-in scale)."""
    dims = [(input_dim, hidden_dim), (hidden_dim, hidden_dim),
            (hidden_dim, output_dim)]
    params = {}
    keys = jax.random.split(key, 12)
    k = 0
    for prefix in ("mean", "lv"):
        for i, (din, dout) in enumerate(dims):
            bound = 1.0 / jnp.sqrt(din)
            params[f"{prefix}_w{i}"] = jax.random.uniform(
                keys[k], (din, dout), jnp.float32, -bound, bound)
            k += 1
            params[f"{prefix}_b{i}"] = jax.random.uniform(
                keys[k], (1, dout), jnp.float32, -bound, bound)
            k += 1
    return params


def _ref_forward(x, p):
    """Pure-JAX reference of LaplaceMLP.forward (mean MLP, exp(logvar MLP))."""
    def mlp(prefix):
        h = x @ p[f"{prefix}_w0"] + p[f"{prefix}_b0"]
        h = jnp.where(h >= 0, h, SLOPE * h)
        h = h @ p[f"{prefix}_w1"] + p[f"{prefix}_b1"]
        h = jnp.where(h >= 0, h, SLOPE * h)
        return h @ p[f"{prefix}_w2"] + p[f"{prefix}_b2"]
    return mlp("mean"), jnp.exp(mlp("lv"))


# TODO(synk): Laplace.sample / Laplace.log_pdf are distribution utilities, not
# part of LaplaceMLP.forward; only the forward pass is implemented as a kernel.

if __name__ == "__main__":
    # LaplaceMLP(input_dim=4, output_dim=4, hidden_dim=32, n_layers=3,
    #            activation='lrelu', slope=0.1)
    B, INPUT_DIM, HIDDEN_DIM, OUTPUT_DIM = 8, 4, 32, 4

    key = jax.random.PRNGKey(0)
    pkey, xkey, xkey2 = jax.random.split(key, 3)
    params = init_params(pkey, INPUT_DIM, HIDDEN_DIM, OUTPUT_DIM)

    # --- small-batch f32 run + exact-ish reference check ---
    fused_f32, out_dim = prepare_fused_params(params, use_bf16=False)
    x = jax.random.normal(xkey, (B, INPUT_DIM), jnp.float32)
    mean, var = laplace_mlp_forward(x, fused_f32, out_dim=out_dim)
    jax.block_until_ready((mean, var))

    ref_mean, ref_var = _ref_forward(x, params)
    assert mean.shape == (B, OUTPUT_DIM) and var.shape == (B, OUTPUT_DIM)
    assert jnp.allclose(mean, ref_mean, atol=1e-5, rtol=1e-5)
    assert jnp.allclose(var, ref_var, atol=1e-5, rtol=1e-5)

    # --- larger batch exercises the multi-tile grid (>=2 parallel steps) ---
    B2 = 2048
    x2 = jax.random.normal(xkey2, (B2, INPUT_DIM), jnp.float32)
    mean2, var2 = laplace_mlp_forward(x2, fused_f32, out_dim=out_dim)
    jax.block_until_ready((mean2, var2))
    ref_mean2, ref_var2 = _ref_forward(x2, params)
    assert jnp.allclose(mean2, ref_mean2, atol=1e-5, rtol=1e-5)
    assert jnp.allclose(var2, ref_var2, atol=1e-5, rtol=1e-5)

    # --- default bf16 MXU-operand path (f32 accumulate/epilogue), loose check ---
    fused_bf16, _ = prepare_fused_params(params, use_bf16=True)
    mean3, var3 = laplace_mlp_forward(x2, fused_bf16, out_dim=out_dim)
    jax.block_until_ready((mean3, var3))
    assert jnp.allclose(mean3, ref_mean2, atol=0.15, rtol=0.15)
    assert jnp.allclose(var3, ref_var2, atol=0.15, rtol=0.15)

    print("KERNEL_OK")
</pallas_src>

<mosaic_0001>
module attributes {stable_mosaic.version = 11 : i64} {
  func.func @laplace_mlp_fused_kernel(%arg0: i32, %arg1: memref<8x4xf32, #tpu.memory_space<vmem>>, %arg2: memref<4x64xf32, #tpu.memory_space<vmem>>, %arg3: memref<1x64xf32, #tpu.memory_space<vmem>>, %arg4: memref<64x64xf32, #tpu.memory_space<vmem>>, %arg5: memref<1x64xf32, #tpu.memory_space<vmem>>, %arg6: memref<64x128xf32, #tpu.memory_space<vmem>>, %arg7: memref<1x128xf32, #tpu.memory_space<vmem>>, %arg8: memref<8x128xf32, #tpu.memory_space<vmem>>) attributes {dimension_semantics = [#tpu.dimension_semantics<parallel>], iteration_bounds = array<i64: 1>, scalar_prefetch = 0 : i64, scratch_operands = 0 : i64, tpu.core_type = #tpu.core_type<tc>, window_params = [{transform_indices = @transform_0, window_bounds = array<i64: 8, 4>}, {pipeline_mode = #tpu.pipeline_mode<synchronous>, transform_indices = @transform_1, window_bounds = array<i64: 4, 64>}, {pipeline_mode = #tpu.pipeline_mode<synchronous>, transform_indices = @transform_2, window_bounds = array<i64: 1, 64>}, {pipeline_mode = #tpu.pipeline_mode<synchronous>, transform_indices = @transform_3, window_bounds = array<i64: 64, 64>}, {pipeline_mode = #tpu.pipeline_mode<synchronous>, transform_indices = @transform_4, window_bounds = array<i64: 1, 64>}, {pipeline_mode = #tpu.pipeline_mode<synchronous>, transform_indices = @transform_5, window_bounds = array<i64: 64, 128>}, {pipeline_mode = #tpu.pipeline_mode<synchronous>, transform_indices = @transform_6, window_bounds = array<i64: 1, 128>}, {transform_indices = @transform_7, window_bounds = array<i64: 8, 128>}]} {
    %c0 = arith.constant 0 : index
    %c0_0 = arith.constant 0 : index
    %0 = vector.load %arg1[%c0, %c0_0] : memref<8x4xf32, #tpu.memory_space<vmem>>, vector<8x4xf32>
    %c0_1 = arith.constant 0 : index
    %c0_2 = arith.constant 0 : index
    %1 = vector.load %arg2[%c0_1, %c0_2] : memref<4x64xf32, #tpu.memory_space<vmem>>, vector<4x64xf32>
    %cst = arith.constant dense<0.000000e+00> : vector<8x64xf32>
    %2 = tpu.matmul %0, %1, %cst {dimension_numbers = #tpu.dot_dimension_numbers<[1], [0], [0], [1], [0, 0, 1, 1], [], []>} : vector<8x4xf32>, vector<4x64xf32>, vector<8x64xf32> -> vector<8x64xf32>
    %c0_3 = arith.constant 0 : index
    %c0_4 = arith.constant 0 : index
    %3 = vector.load %arg3[%c0_3, %c0_4] : memref<1x64xf32, #tpu.memory_space<vmem>>, vector<1x64xf32>
    %4 = vector.broadcast %3 : vector<1x64xf32> to vector<8x64xf32>
    %5 = arith.addf %2, %4 : vector<8x64xf32>
    %cst_5 = arith.constant 0.000000e+00 : f32
    %6 = vector.broadcast %cst_5 : f32 to vector<8x64xf32>
    %7 = arith.cmpf oge, %5, %6 : vector<8x64xf32>
    %cst_6 = arith.constant 1.000000e-01 : f32
    %8 = vector.broadcast %cst_6 : f32 to vector<8x64xf32>
    %9 = arith.mulf %8, %5 : vector<8x64xf32>
    %10 = arith.select %7, %5, %9 : vector<8x64xi1>, vector<8x64xf32>
    %c0_7 = arith.constant 0 : index
    %c0_8 = arith.constant 0 : index
    %11 = vector.load %arg4[%c0_7, %c0_8] : memref<64x64xf32, #tpu.memory_space<vmem>>, vector<64x64xf32>
    %cst_9 = arith.constant dense<0.000000e+00> : vector<8x64xf32>
    %12 = tpu.matmul %10, %11, %cst_9 {dimension_numbers = #tpu.dot_dimension_numbers<[1], [0], [0], [1], [0, 0, 1, 1], [], []>} : vector<8x64xf32>, vector<64x64xf32>, vector<8x64xf32> -> vector<8x64xf32>
    %c0_10 = arith.constant 0 : index
    %c0_11 = arith.constant 0 : index
    %13 = vector.load %arg5[%c0_10, %c0_11] : memref<1x64xf32, #tpu.memory_space<vmem>>, vector<1x64xf32>
    %14 = vector.broadcast %13 : vector<1x64xf32> to vector<8x64xf32>
    %15 = arith.addf %12, %14 : vector<8x64xf32>
    %cst_12 = arith.constant 0.000000e+00 : f32
    %16 = vector.broadcast %cst_12 : f32 to vector<8x64xf32>
    %17 = arith.cmpf oge, %15, %16 : vector<8x64xf32>
    %cst_13 = arith.constant 1.000000e-01 : f32
    %18 = vector.broadcast %cst_13 : f32 to vector<8x64xf32>
    %19 = arith.mulf %18, %15 : vector<8x64xf32>
    %20 = arith.select %17, %15, %19 : vector<8x64xi1>, vector<8x64xf32>
    %c0_14 = arith.constant 0 : index
    %c0_15 = arith.constant 0 : index
    %21 = vector.load %arg6[%c0_14, %c0_15] : memref<64x128xf32, #tpu.memory_space<vmem>>, vector<64x128xf32>
    %cst_16 = arith.constant dense<0.000000e+00> : vector<8x128xf32>
    %22 = tpu.matmul %20, %21, %cst_16 {dimension_numbers = #tpu.dot_dimension_numbers<[1], [0], [0], [1], [0, 0, 1, 1], [], []>} : vector<8x64xf32>, vector<64x128xf32>, vector<8x128xf32> -> vector<8x128xf32>
    %c0_17 = arith.constant 0 : index
    %c0_18 = arith.constant 0 : index
    %23 = vector.load %arg7[%c0_17, %c0_18] : memref<1x128xf32, #tpu.memory_space<vmem>>, vector<1x128xf32>
    %24 = vector.broadcast %23 : vector<1x128xf32> to vector<8x128xf32>
    %25 = arith.addf %22, %24 : vector<8x128xf32>
    %26 = tpu.iota {dimensions = array<i32: 1>} : vector<8x128xi32>
    %c4_i32 = arith.constant 4 : i32
    %27 = vector.broadcast %c4_i32 : i32 to vector<8x128xi32>
    %28 = arith.cmpi sge, %26, %27 : vector<8x128xi32>
    %c8_i32 = arith.constant 8 : i32
    %29 = vector.broadcast %c8_i32 : i32 to vector<8x128xi32>
    %30 = arith.cmpi slt, %26, %29 : vector<8x128xi32>
    %31 = arith.andi %28, %30 : vector<8x128xi1>
    %32 = math.exp %25 : vector<8x128xf32>
    %33 = arith.select %31, %32, %25 : vector<8x128xi1>, vector<8x128xf32>
    %c0_19 = arith.constant 0 : index
    %c0_20 = arith.constant 0 : index
    %34 = vector.load %arg8[%c0_19, %c0_20] : memref<8x128xf32, #tpu.memory_space<vmem>>, vector<8x128xf32>
    tpu.vector_store %arg8[%c0_19, %c0_20], %33 {strides = array<i32>} : memref<8x128xf32, #tpu.memory_space<vmem>>, vector<8x128xf32>,
    return
  }
  func.func @transform_0(%arg0: i32) -> (i32, i32) {
    %c0_i32 = arith.constant 0 : i32
    %c0_i32_0 = arith.constant 0 : i32
    return %arg0, %c0_i32 : i32, i32
  }
  func.func @transform_1(%arg0: i32) -> (i32, i32) {
    %c0_i32 = arith.constant 0 : i32
    %c0_i32_0 = arith.constant 0 : i32
    %c0_i32_1 = arith.constant 0 : i32
    return %c0_i32, %c0_i32_0 : i32, i32
  }
  func.func @transform_2(%arg0: i32) -> (i32, i32) {
    %c0_i32 = arith.constant 0 : i32
    %c0_i32_0 = arith.constant 0 : i32
    %c0_i32_1 = arith.constant 0 : i32
    return %c0_i32, %c0_i32_0 : i32, i32
  }
  func.func @transform_3(%arg0: i32) -> (i32, i32) {
    %c0_i32 = arith.constant 0 : i32
    %c0_i32_0 = arith.constant 0 : i32
    %c0_i32_1 = arith.constant 0 : i32
    return %c0_i32, %c0_i32_0 : i32, i32
  }
  func.func @transform_4(%arg0: i32) -> (i32, i32) {
    %c0_i32 = arith.constant 0 : i32
    %c0_i32_0 = arith.constant 0 : i32
    %c0_i32_1 = arith.constant 0 : i32
    return %c0_i32, %c0_i32_0 : i32, i32
  }
  func.func @transform_5(%arg0: i32) -> (i32, i32) {
    %c0_i32 = arith.constant 0 : i32
    %c0_i32_0 = arith.constant 0 : i32
    %c0_i32_1 = arith.constant 0 : i32
    return %c0_i32, %c0_i32_0 : i32, i32
  }
  func.func @transform_6(%arg0: i32) -> (i32, i32) {
    %c0_i32 = arith.constant 0 : i32
    %c0_i32_0 = arith.constant 0 : i32
    %c0_i32_1 = arith.constant 0 : i32
    return %c0_i32, %c0_i32_0 : i32, i32
  }
  func.func @transform_7(%arg0: i32) -> (i32, i32) {
    %c0_i32 = arith.constant 0 : i32
    %c0_i32_0 = arith.constant 0 : i32
    return %arg0, %c0_i32 : i32, i32
  }
}

</mosaic_0001>

<llo_original>
// kernel: laplace_mlp_forward.1
$region0: #{laplace_mlp_forward.1}
  #allocation0 [shape = 'u32[]', space=smem, size = 0x4, offset = 0x4, fixed_abs, tag = 'smem constant byte address 0x4 - core index']
  #allocation1 [shape = 'u32[144,128]{1,0:T(1,128)}', space=vmem, size = 0x12000, scoped, tag = 'internal scratch']
  %s0 = inlined_call_operand.vmem [shape: f32[8,4], index: 0, kind: input, shape index: {}]
  %s1 = inlined_call_operand.vmem [shape: f32[4,64], index: 1, kind: input, shape index: {}]
  %s2 = inlined_call_operand.vmem [shape: f32[1,64], index: 2, kind: input, shape index: {}]
  %s3 = inlined_call_operand.hbm [shape: f32[64,64], index: 3, kind: input, shape index: {}]
  %s4 = inlined_call_operand.vmem [shape: f32[1,64], index: 4, kind: input, shape index: {}]
  %s5 = inlined_call_operand.hbm [shape: f32[64,128], index: 5, kind: input, shape index: {}]
  %s6 = inlined_call_operand.vmem [shape: f32[1,128], index: 6, kind: input, shape index: {}]
  %s7 = inlined_call_operand.vmem [shape: f32[8,128], index: 7, kind: output, shape index: {}]
  %s8 = sld [smem:[#allocation0]]
  $region46: #{laplace_mlp_forward.1} parent=0
    _
  %s10 = ssub.s32 1, %s8
  %s11 = scalar_select 0, %s10, %s8
  $region1: #{laplace_mlp_forward.1} parent=0
    #allocation2 [shape = 'u8[32768]{0}', space=vmem, size = 0x8000, scoped, tag = 'input window, operand 3, single buffered']
    #allocation3 [shape = 's32[1]{0}', space=sflag, size = 0x4, scoped, tag = 'scoped memory for laplace_mlp_forward.1']
    #allocation4 [shape = 'u8[32768]{0}', space=vmem, size = 0x8000, scoped, tag = 'input window, operand 5, single buffered']
    #allocation5 [shape = 's32[1]{0}', space=sflag, size = 0x4, scoped, tag = 'scoped memory for laplace_mlp_forward.1']
    %12 = vsyncpa [#allocation3], 0
    %13 = vsyncpa [#allocation5], 0
    // Predicated region
    $region2: #{laplace_mlp_forward.1} parent=1 // pred_check
      _
    $region3: #{laplace_mlp_forward.1} parent=1 // pred_check_branch
      %15 = sbr.rel (0) target = $region5
    $region4: #{laplace_mlp_forward.1} parent=1 // pred_region
      _
    $region5: #{laplace_mlp_forward.1} parent=1 // pred_fallthru
      _
    // Predicated region
    $region6: #{laplace_mlp_forward.1} parent=1 // pred_check
      _
    $region7: #{laplace_mlp_forward.1} parent=1 // pred_check_branch
      %17 = sbr.rel (0) target = $region9
    $region8: #{laplace_mlp_forward.1} parent=1 // pred_region
      _
    $region9: #{laplace_mlp_forward.1} parent=1 // pred_fallthru
      _
    // Predicated region
    $region10: #{laplace_mlp_forward.1} parent=1 // pred_check
      _
    $region11: #{laplace_mlp_forward.1} parent=1 // pred_check_branch
      %19 = sbr.rel (0) target = $region13
    $region12: #{laplace_mlp_forward.1} parent=1 // pred_region
      _
    $region13: #{laplace_mlp_forward.1} parent=1 // pred_fallthru
      _
    // Predicated region
    $region14: #{laplace_mlp_forward.1} parent=1 // pred_check
      _
    $region15: #{laplace_mlp_forward.1} parent=1 // pred_check_branch
      %21 = sbr.rel (0) target = $region17
    $region16: #{laplace_mlp_forward.1} parent=1 // pred_region
      %s23 = ssub.s32 1024, 1024
      %24 = vsyncadd [#allocation3], %s23
      %s25 = sshll.u32 [#allocation2], 4
      %s26 = int_to_ptr.vmem [resolvable:$true] %s25
      %31 = dma.hbm_to_vmem [thread:$0]  %s3, 1024, %s26, [#allocation3], 128, 128, 8
    $region17: #{laplace_mlp_forward.1} parent=1 // pred_fallthru
      _
    // Predicated region
    $region18: #{laplace_mlp_forward.1} parent=1 // pred_check
      _
    $region19: #{laplace_mlp_forward.1} parent=1 // pred_check_branch
      %33 = sbr.rel (0) target = $region21
    $region20: #{laplace_mlp_forward.1} parent=1 // pred_region
      _
    $region21: #{laplace_mlp_forward.1} parent=1 // pred_fallthru
      _
    // Predicated region
    $region22: #{laplace_mlp_forward.1} parent=1 // pred_check
      _
    $region23: #{laplace_mlp_forward.1} parent=1 // pred_check_branch
      %35 = sbr.rel (0) target = $region25
    $region24: #{laplace_mlp_forward.1} parent=1 // pred_region
      %s37 = ssub.s32 1024, 1024
      %38 = vsyncadd [#allocation5], %s37
      %s39 = sshll.u32 [#allocation4], 4
      %s40 = int_to_ptr.vmem [resolvable:$true] %s39
      %45 = dma.hbm_to_vmem [thread:$0]  %s5, 1024, %s40, [#allocation5], 128, 128, 8
    $region25: #{laplace_mlp_forward.1} parent=1 // pred_fallthru
      _
    // Predicated region
    $region26: #{laplace_mlp_forward.1} parent=1 // pred_check
      _
    $region27: #{laplace_mlp_forward.1} parent=1 // pred_check_branch
      %47 = sbr.rel (0) target = $region29
    $region28: #{laplace_mlp_forward.1} parent=1 // pred_region
      _
    $region29: #{laplace_mlp_forward.1} parent=1 // pred_fallthru
      _
    // Predicated region
    $region30: #{laplace_mlp_forward.1} parent=1 // pred_check
      _
    $region31: #{laplace_mlp_forward.1} parent=1 // pred_check_branch
      %49 = sbr.rel (0) target = $region33
    $region32: #{laplace_mlp_forward.1} parent=1 // pred_region
      %50 = dma.done [#allocation3], 1024
    $region33: #{laplace_mlp_forward.1} parent=1 // pred_fallthru
      _
    // Predicated region
    $region34: #{laplace_mlp_forward.1} parent=1 // pred_check
      _
    $region35: #{laplace_mlp_forward.1} parent=1 // pred_check_branch
      %52 = sbr.rel (0) target = $region37
    $region36: #{laplace_mlp_forward.1} parent=1 // pred_region
      %53 = dma.done [#allocation5], 1024
    $region37: #{laplace_mlp_forward.1} parent=1 // pred_fallthru
      _
    %v54 = vld [vmem:[%s0] sm:$0xff]
    %v55 = vld [vmem:[%s1] sm:$0xf]
    %v56 = vld [vmem:[%s2] sm:$0x1]
    %v58 = vlaneseq
    %v59 = vshrl.u32 %v58, 7
    %v60 = vsub.s32 0, %v59
    %v61 = vrot.slane %v56, %v60
    %vm63 = vcmask 31744
    %v65 = vsel %vm63, %v54, 0
    %vm67 = vcmask 1043456
    %v69 = vsel %vm67, %v55, 0
    %71 = vmatprep.subr.mxu0 0.0
    %72 = vmatpush1.msra.mxu0 %v69
    %73 = vmatprep.subr.mxu0 0.0
    %74 = vmatpush1.msra.mxu0 0.0
    %75 = vmatprep.subr.mxu0 0.0
    %76 = vmatpush1.msra.mxu0 0.0
    %77 = vmatprep.subr.mxu0 0.0
    %78 = vmatpush1.msra.mxu0 0.0
    %79 = vmatprep.subr.mxu0 0.0
    %80 = vmatpush1.msra.mxu0 0.0
    %81 = vmatprep.subr.mxu0 0.0
    %82 = vmatpush1.msra.mxu0 0.0
    %83 = vmatprep.subr.mxu0 0.0
    %84 = vmatpush1.msra.mxu0 0.0
    %85 = vmatprep.subr.mxu0 0.0
    %86 = vmatpush1.msra.mxu0 0.0
    %87 = vmatprep.subr.mxu0 0.0
    %88 = vmatpush1.msra.mxu0 0.0
    %89 = vmatprep.subr.mxu0 0.0
    %90 = vmatpush1.msra.mxu0 0.0
    %91 = vmatprep.subr.mxu0 0.0
    %92 = vmatpush1.msra.mxu0 0.0
    %93 = vmatprep.subr.mxu0 0.0
    %94 = vmatpush1.msra.mxu0 0.0
    %95 = vmatprep.subr.mxu0 0.0
    %96 = vmatpush1.msra.mxu0 0.0
    %97 = vmatprep.subr.mxu0 0.0
    %98 = vmatpush1.msra.mxu0 0.0
    %99 = vmatprep.subr.mxu0 0.0
    %100 = vmatpush1.msra.mxu0 0.0
    %101 = vmatprep.subr.mxu0 0.0
    %102 = vmatpush1.msra.mxu0 0.0
    %103 = vmatprep.subr.mxu0 0.0
    %104 = vmatpush1.msra.mxu0 0.0
    %105 = vmatprep.subr.mxu0 0.0
    %106 = vmatpush1.msra.mxu0 0.0
    %107 = vmatprep.subr.mxu0 0.0
    %108 = vmatpush1.msra.mxu0 0.0
    %109 = vmatprep.subr.mxu0 0.0
    %110 = vmatpush1.msra.mxu0 0.0
    %111 = vmatprep.subr.mxu0 0.0
    %112 = vmatpush1.msra.mxu0 0.0
    %113 = vmatprep.subr.mxu0 0.0
    %114 = vmatpush1.msra.mxu0 0.0
    %115 = vmatprep.subr.mxu0 0.0
    %116 = vmatpush1.msra.mxu0 0.0
    %117 = vmatprep.subr.mxu0 0.0
    %118 = vmatpush1.msra.mxu0 0.0
    %119 = vmatprep.subr.mxu0 0.0
    %120 = vmatpush1.msra.mxu0 0.0
    %121 = vmatprep.subr.mxu0 0.0
    %122 = vmatpush1.msra.mxu0 0.0
    %123 = vmatprep.subr.mxu0 0.0
    %124 = vmatpush1.msra.mxu0 0.0
    %125 = vmatprep.subr.mxu0 0.0
    %126 = vmatpush1.msra.mxu0 0.0
    %127 = vmatprep.subr.mxu0 0.0
    %128 = vmatpush1.msra.mxu0 0.0
    %129 = vmatprep.subr.mxu0 0.0
    %130 = vmatpush1.msra.mxu0 0.0
    %131 = vmatprep.subr.mxu0 0.0
    %132 = vmatpush1.msra.mxu0 0.0
    %133 = vmatprep.subr.mxu0 0.0
    %134 = vmatpush1.msra.mxu0 0.0
    %135 = vmatprep.mubr.f32.mxu0 0.0
    %136 = vmatmul.mubr.f32.gmra.mrb[0].mxu0 %v65
    %v137 = vpop.f32.mrb[0].mxu0
    %v138 = vadd.f32 %v61, %v137
    %v139 = vpop.f32.mrb[0].mxu0
    %140 = vdwg.mxu0
    %vm141 = vcmp.ge.f32.partialorder %v138, 0.0
    %v142 = vmul.f32 %v138, 0.1
    %v143 = vsel %vm141, %v138, %v142
    %v144 = vld [vmem:[#allocation2] sm:$0xff]
    %v145 = vld [vmem:[#allocation2 + $0x8] sm:$0xff]
    %v146 = vld [vmem:[#allocation2 + $0x10] sm:$0xff]
    %v147 = vld [vmem:[#allocation2 + $0x18] sm:$0xff]
    %v148 = vld [vmem:[#allocation2 + $0x20] sm:$0xff]
    %v149 = vld [vmem:[#allocation2 + $0x28] sm:$0xff]
    %v150 = vld [vmem:[#allocation2 + $0x30] sm:$0xff]
    %v151 = vld [vmem:[#allocation2 + $0x38] sm:$0xff]
    %v152 = vld [vmem:[%s4] sm:$0x1]
    %v154 = vlaneseq
    %v155 = vshrl.u32 %v154, 7
    %v156 = vsub.s32 0, %v155
    %v157 = vrot.slane %v152, %v156
    %vm159 = vcmask 523264
    %v161 = vsel %vm159, %v143, 0
    %163 = vmatprep.subr.mxu0 0.0
    %164 = vmatpush1.msra.mxu0 %v144
    %165 = vmatprep.subr.mxu0 0.0
    %166 = vmatpush1.msra.mxu0 %v145
    %167 = vmatprep.subr.mxu0 0.0
    %168 = vmatpush1.msra.mxu0 %v146
    %169 = vmatprep.subr.mxu0 0.0
    %170 = vmatpush1.msra.mxu0 %v147
    %171 = vmatprep.subr.mxu0 0.0
    %172 = vmatpush1.msra.mxu0 %v148
    %173 = vmatprep.subr.mxu0 0.0
    %174 = vmatpush1.msra.mxu0 %v149
    %175 = vmatprep.subr.mxu0 0.0
    %176 = vmatpush1.msra.mxu0 %v150
    %177 = vmatprep.subr.mxu0 0.0
    %178 = vmatpush1.msra.mxu0 %v151
    %179 = vmatprep.subr.mxu0 0.0
    %180 = vmatpush1.msra.mxu0 0.0
    %181 = vmatprep.subr.mxu0 0.0
    %182 = vmatpush1.msra.mxu0 0.0
    %183 = vmatprep.subr.mxu0 0.0
    %184 = vmatpush1.msra.mxu0 0.0
    %185 = vmatprep.subr.mxu0 0.0
    %186 = vmatpush1.msra.mxu0 0.0
    %187 = vmatprep.subr.mxu0 0.0
    %188 = vmatpush1.msra.mxu0 0.0
    %189 = vmatprep.subr.mxu0 0.0
    %190 = vmatpush1.msra.mxu0 0.0
    %191 = vmatprep.subr.mxu0 0.0
    %192 = vmatpush1.msra.mxu0 0.0
    %193 = vmatprep.subr.mxu0 0.0
    %194 = vmatpush1.msra.mxu0 0.0
    %195 = vmatprep.subr.mxu0 0.0
    %196 = vmatpush1.msra.mxu0 0.0
    %197 = vmatprep.subr.mxu0 0.0
    %198 = vmatpush1.msra.mxu0 0.0
    %199 = vmatprep.subr.mxu0 0.0
    %200 = vmatpush1.msra.mxu0 0.0
    %201 = vmatprep.subr.mxu0 0.0
    %202 = vmatpush1.msra.mxu0 0.0
    %203 = vmatprep.subr.mxu0 0.0
    %204 = vmatpush1.msra.mxu0 0.0
    %205 = vmatprep.subr.mxu0 0.0
    %206 = vmatpush1.msra.mxu0 0.0
    %207 = vmatprep.subr.mxu0 0.0
    %208 = vmatpush1.msra.mxu0 0.0
    %209 = vmatprep.subr.mxu0 0.0
    %210 = vmatpush1.msra.mxu0 0.0
    %211 = vmatprep.subr.mxu0 0.0
    %212 = vmatpush1.msra.mxu0 0.0
    %213 = vmatprep.subr.mxu0 0.0
    %214 = vmatpush1.msra.mxu0 0.0
    %215 = vmatprep.subr.mxu0 0.0
    %216 = vmatpush1.msra.mxu0 0.0
    %217 = vmatprep.subr.mxu0 0.0
    %218 = vmatpush1.msra.mxu0 0.0
    %219 = vmatprep.subr.mxu0 0.0
    %220 = vmatpush1.msra.mxu0 0.0
    %221 = vmatprep.subr.mxu0 0.0
    %222 = vmatpush1.msra.mxu0 0.0
    %223 = vmatprep.subr.mxu0 0.0
    %224 = vmatpush1.msra.mxu0 0.0
    %225 = vmatprep.subr.mxu0 0.0
    %226 = vmatpush1.msra.mxu0 0.0
    %227 = vmatprep.mubr.f32.mxu0 0.0
    %228 = vmatmul.mubr.f32.gmra.mrb[0].mxu0 %v161
    %v229 = vpop.f32.mrb[0].mxu0
    %v230 = vadd.f32 %v157, %v229
    %v231 = vpop.f32.mrb[0].mxu0
    %232 = vdwg.mxu0
    %vm233 = vcmp.ge.f32.partialorder %v230, 0.0
    %v234 = vmul.f32 %v230, 0.1
    %v235 = vsel %vm233, %v230, %v234
    %v236 = vld [vmem:[#allocation4] sm:$0xff]
    %v237 = vld [vmem:[#allocation4 + $0x8] sm:$0xff]
    %v238 = vld [vmem:[#allocation4 + $0x10] sm:$0xff]
    %v239 = vld [vmem:[#allocation4 + $0x18] sm:$0xff]
    %v240 = vld [vmem:[#allocation4 + $0x20] sm:$0xff]
    %v241 = vld [vmem:[#allocation4 + $0x28] sm:$0xff]
    %v242 = vld [vmem:[#allocation4 + $0x30] sm:$0xff]
    %v243 = vld [vmem:[#allocation4 + $0x38] sm:$0xff]
    %v244 = vld [vmem:[%s6] sm:$0x1]
    %v246 = vlaneseq
    %v247 = vshrl.u32 %v246, 7
    %v248 = vsub.s32 0, %v247
    %v249 = vrot.slane %v244, %v248
    %v252 = vsel %vm159, %v235, 0
    %254 = vmatprep.subr.mxu0 0.0
    %255 = vmatpush1.msra.mxu0 %v236
    %256 = vmatprep.subr.mxu0 0.0
    %257 = vmatpush1.msra.mxu0 %v237
    %258 = vmatprep.subr.mxu0 0.0
    %259 = vmatpush1.msra.mxu0 %v238
    %260 = vmatprep.subr.mxu0 0.0
    %261 = vmatpush1.msra.mxu0 %v239
    %262 = vmatprep.subr.mxu0 0.0
    %263 = vmatpush1.msra.mxu0 %v240
    %264 = vmatprep.subr.mxu0 0.0
    %265 = vmatpush1.msra.mxu0 %v241
    %266 = vmatprep.subr.mxu0 0.0
    %267 = vmatpush1.msra.mxu0 %v242
    %268 = vmatprep.subr.mxu0 0.0
    %269 = vmatpush1.msra.mxu0 %v243
    %270 = vmatprep.subr.mxu0 0.0
    %271 = vmatpush1.msra.mxu0 0.0
    %272 = vmatprep.subr.mxu0 0.0
    %273 = vmatpush1.msra.mxu0 0.0
    %274 = vmatprep.subr.mxu0 0.0
    %275 = vmatpush1.msra.mxu0 0.0
    %276 = vmatprep.subr.mxu0 0.0
    %277 = vmatpush1.msra.mxu0 0.0
    %278 = vmatprep.subr.mxu0 0.0
    %279 = vmatpush1.msra.mxu0 0.0
    %280 = vmatprep.subr.mxu0 0.0
    %281 = vmatpush1.msra.mxu0 0.0
    %282 = vmatprep.subr.mxu0 0.0
    %283 = vmatpush1.msra.mxu0 0.0
    %284 = vmatprep.subr.mxu0 0.0
    %285 = vmatpush1.msra.mxu0 0.0
    %286 = vmatprep.subr.mxu0 0.0
    %287 = vmatpush1.msra.mxu0 0.0
    %288 = vmatprep.subr.mxu0 0.0
    %289 = vmatpush1.msra.mxu0 0.0
    %290 = vmatprep.subr.mxu0 0.0
    %291 = vmatpush1.msra.mxu0 0.0
    %292 = vmatprep.subr.mxu0 0.0
    %293 = vmatpush1.msra.mxu0 0.0
    %294 = vmatprep.subr.mxu0 0.0
    %295 = vmatpush1.msra.mxu0 0.0
    %296 = vmatprep.subr.mxu0 0.0
    %297 = vmatpush1.msra.mxu0 0.0
    %298 = vmatprep.subr.mxu0 0.0
    %299 = vmatpush1.msra.mxu0 0.0
    %300 = vmatprep.subr.mxu0 0.0
    %301 = vmatpush1.msra.mxu0 0.0
    %302 = vmatprep.subr.mxu0 0.0
    %303 = vmatpush1.msra.mxu0 0.0
    %304 = vmatprep.subr.mxu0 0.0
    %305 = vmatpush1.msra.mxu0 0.0
    %306 = vmatprep.subr.mxu0 0.0
    %307 = vmatpush1.msra.mxu0 0.0
    %308 = vmatprep.subr.mxu0 0.0
    %309 = vmatpush1.msra.mxu0 0.0
    %310 = vmatprep.subr.mxu0 0.0
    %311 = vmatpush1.msra.mxu0 0.0
    %312 = vmatprep.subr.mxu0 0.0
    %313 = vmatpush1.msra.mxu0 0.0
    %314 = vmatprep.subr.mxu0 0.0
    %315 = vmatpush1.msra.mxu0 0.0
    %316 = vmatprep.subr.mxu0 0.0
    %317 = vmatpush1.msra.mxu0 0.0
    %318 = vmatprep.mubr.f32.mxu0 0.0
    %319 = vmatmul.mubr.f32.gmra.mrb[0].mxu0 %v252
    %v320 = vpop.f32.mrb[0].mxu0
    %v321 = vadd.f32 %v249, %v320
    %v322 = vpop.f32.mrb[0].mxu0
    %323 = vdwg.mxu0
    %v324 = vlaneseq
    %v325 = vand.u32 %v324, 127
    %vm326 = vcmp.ge.s32.totalorder %v325, 4
    %vm327 = vcmp.lt.s32.totalorder %v325, 8
    %vm328 = vmand %vm326, %vm327
    %v329 = vmul.f32 %v321, 1.442695
    %v330 = vpow.pop %v329
    %v331 = vsel %vm328, %v330, %v321
    %332 = vst [vmem:[%s7] sm:$0xff] %v331
    // Predicated region
    $region38: #{laplace_mlp_forward.1} parent=1 // pred_check
      _
    $region39: #{laplace_mlp_forward.1} parent=1 // pred_check_branch
      %334 = sbr.rel (0) target = $region41
    $region40: #{laplace_mlp_forward.1} parent=1 // pred_region
      _
    $region41: #{laplace_mlp_forward.1} parent=1 // pred_fallthru
      _
    // Predicated region
    $region42: #{laplace_mlp_forward.1} parent=1 // pred_check
      _
    $region43: #{laplace_mlp_forward.1} parent=1 // pred_check_branch
      %336 = sbr.rel (0) target = $region45
    $region44: #{laplace_mlp_forward.1} parent=1 // pred_region
      _
    $region45: #{laplace_mlp_forward.1} parent=1 // pred_fallthru
      _
    %337 = vsyncpa [#allocation3], 1
    %338 = vsyncpa [#allocation5], 1

</llo_original>
